<compile_context>
chip_gen: v6e
topology: v6e:2x2x1
jax: 0.10.0
libtpu: 0.0.40
codegen_flags: <defaults>
</compile_context>

<pallas_src>
import math

import jax
import jax.numpy as jnp
from jax.experimental import pallas as pl
from jax.experimental.pallas import tpu as pltpu

_LANE = 128      # lane width of a vreg
_SUBLANE = 8     # sublanes of a 32-bit vreg


def _copy_kernel(x_ref, o_ref):
    # Dense tile copy: unmasked loads/stores, purely DMA/HBM-bound.
    o_ref[...] = x_ref[...]


def _generation_budget():
    """(per-block byte budget, vmem_limit_bytes) tuned per TPU generation."""
    kind = ""
    try:
        kind = jax.devices()[0].device_kind.lower()
    except Exception:  # pragma: no cover - defensive, keep conservative default
        pass
    if any(tag in kind for tag in ("v6", "v7", "7x")):
        # v6e (~1.4 TB/s HBM): 4 MiB blocks amortize the ~0.35us/step overhead.
        # v7x (64 MiB physical VMEM): 4 MiB keeps 2x(in+out) double buffers at
        # 16 MiB, half of the 32 MiB scoped default.
        return 4 * 1024 * 1024, 32 * 1024 * 1024
    # v5e (16 MiB scoped-VMEM default, ~0.82 TB/s) and older/unknown chips:
    # 2 MiB blocks -> 8 MiB of double buffers, inside the default limit.
    return 2 * 1024 * 1024, None


def _choose_row_tile(rows: int, itemsize: int, budget_bytes: int) -> int:
    """Row tile for the lane-dense (rows, 128) slab.

    * multiple of the dtype's native sublane packing tile (8 f32 / 16 bf16 /
      32 int8-fp8) so stores stay unmasked,
    * ~budget_bytes per block,
    * >= 4 grid blocks when the slab is big enough (>= 2 blocks per
      TensorCore on v7x megacore, so each core keeps its pipeline fed).
    The grid uses cdiv, so the tile does NOT have to divide `rows`; Pallas
    clips the partial edge block.
    """
    pack = _SUBLANE * max(1, 4 // itemsize)
    if rows <= 4 * pack:
        return rows                                   # tiny slab: one full block
    budget_rows = max(pack, (budget_bytes // (_LANE * itemsize)) // pack * pack)
    quarter_rows = max(pack, (rows // 4) // pack * pack)   # >= 4 blocks
    return min(budget_rows, quarter_rows)


def transform_flatten(x: jax.Array) -> jax.Array:
    """Transform layer with transform_fun = flatten(start_dim=1).

    x: (B, ...) -> (B, prod(rest))
    """
    B = x.shape[0]
    N = math.prod(x.shape[1:])
    out_shape = (B, N)
    x_flat = x.reshape(out_shape)          # metadata-only reshape

    total = B * N
    if total == 0:
        return x_flat

    itemsize = jnp.dtype(x.dtype).itemsize
    budget, vmem_limit = _generation_budget()
    cost = pl.CostEstimate(flops=0, transcendentals=0,
                           bytes_accessed=2 * total * itemsize)
    cparams = pltpu.CompilerParams(dimension_semantics=("parallel",),
                                   vmem_limit_bytes=vmem_limit)

    if total % _LANE == 0:
        # Re-view the flat buffer as a lane-dense (rows, 128) slab (free) so
        # every block is a dense multiple of the (8, 128) vreg tile.
        rows = total // _LANE
        tb = _choose_row_tile(rows, itemsize, budget)
        slab = x_flat.reshape(rows, _LANE)

        copy = pl.pallas_call(
            _copy_kernel,
            out_shape=jax.ShapeDtypeStruct((rows, _LANE), x.dtype),
            grid_spec=pltpu.PrefetchScalarGridSpec(
                num_scalar_prefetch=0,
                grid=(pl.cdiv(rows, tb),),
                in_specs=[pl.BlockSpec((tb, _LANE), lambda r: (r, 0))],
                out_specs=pl.BlockSpec((tb, _LANE), lambda r: (r, 0)),
            ),
            compiler_params=cparams,
            cost_estimate=cost,
            input_output_aliases={0: 0},
        )
        # `slab` is an internal temporary, so donating it is safe and lets the
        # identity copy reuse the HBM buffer in place.
        out = jax.jit(copy, donate_argnums=(0,))(slab)
        return out.reshape(out_shape)

    # Ragged fallback (total not a multiple of 128): tile over batch rows with
    # blocks of (tb, N) kept within the same byte budget, cdiv grid.
    row_bytes = N * itemsize
    budget_rows = max(1, budget // row_bytes)
    if budget_rows >= B:
        tb = B                                        # whole array, one block
    else:
        tb = max(_SUBLANE, (budget_rows // _SUBLANE) * _SUBLANE)
        if tb >= B:
            tb = B

    copy = pl.pallas_call(
        _copy_kernel,
        out_shape=jax.ShapeDtypeStruct(out_shape, x.dtype),
        grid_spec=pltpu.PrefetchScalarGridSpec(
            num_scalar_prefetch=0,
            grid=(pl.cdiv(B, tb),),
            in_specs=[pl.BlockSpec((tb, N), lambda b: (b, 0))],
            out_specs=pl.BlockSpec((tb, N), lambda b: (b, 0)),
        ),
        compiler_params=cparams,
        cost_estimate=cost,
        input_output_aliases={0: 0},
    )
    return jax.jit(copy, donate_argnums=(0,))(x_flat)


if __name__ == "__main__":
    key = jax.random.PRNGKey(0)

    # Primary example shape (NCHW-like), small per the module's doc example.
    B, C, H, W = 2, 4, 16, 16
    x = jax.random.normal(key, (B, C, H, W), dtype=jnp.float32)
    y_ref = x.reshape(B, C * H * W)
    y = jax.block_until_ready(transform_flatten(x))
    assert y.shape == (B, C * H * W), f"bad shape {y.shape}"
    assert y.dtype == x.dtype
    assert bool(jnp.array_equal(y, y_ref)), "kernel output mismatch"

    # Multi-block lane-dense path with a partial (cdiv-clipped) edge block.
    x2 = jax.random.normal(jax.random.PRNGKey(1), (2, 5, 24, 128), jnp.float32)
    y2 = jax.block_until_ready(transform_flatten(x2))
    assert bool(jnp.array_equal(y2, x2.reshape(2, 5 * 24 * 128))), "multi-block mismatch"

    # bf16 input (16-row native sublane packing tile).
    x3 = jax.random.normal(jax.random.PRNGKey(2), (2, 8, 16, 16)).astype(jnp.bfloat16)
    y3 = jax.block_until_ready(transform_flatten(x3))
    assert bool(jnp.array_equal(y3, x3.reshape(2, 8 * 16 * 16))), "bf16 mismatch"

    # Ragged fallback, matching the module's doctest shape (2, 3, 4) -> (2, 12).
    x4 = jax.random.normal(jax.random.PRNGKey(3), (2, 3, 4), jnp.float32)
    y4 = jax.block_until_ready(transform_flatten(x4))
    assert y4.shape == (2, 12)
    assert bool(jnp.array_equal(y4, x4.reshape(2, 12))), "fallback mismatch"

    print("KERNEL_OK")
</pallas_src>

<mosaic_0001>
module attributes {stable_mosaic.version = 11 : i64} {
  func.func @_copy_kernel(%arg0: i32, %arg1: memref<16x128xf32, #tpu.memory_space<vmem>>, %arg2: memref<16x128xf32, #tpu.memory_space<vmem>>) attributes {dimension_semantics = [#tpu.dimension_semantics<parallel>], iteration_bounds = array<i64: 1>, scalar_prefetch = 0 : i64, scratch_operands = 0 : i64, tpu.core_type = #tpu.core_type<tc>, window_params = [{transform_indices = @transform_0, window_bounds = array<i64: 16, 128>}, {transform_indices = @transform_1, window_bounds = array<i64: 16, 128>}]} {
    %c0 = arith.constant 0 : index
    %c0_0 = arith.constant 0 : index
    %0 = vector.load %arg1[%c0, %c0_0] : memref<16x128xf32, #tpu.memory_space<vmem>>, vector<16x128xf32>
    %c0_1 = arith.constant 0 : index
    %c0_2 = arith.constant 0 : index
    %1 = vector.load %arg2[%c0_1, %c0_2] : memref<16x128xf32, #tpu.memory_space<vmem>>, vector<16x128xf32>
    tpu.vector_store %arg2[%c0_1, %c0_2], %0 {strides = array<i32>} : memref<16x128xf32, #tpu.memory_space<vmem>>, vector<16x128xf32>,
    return
  }
  func.func @transform_0(%arg0: i32) -> (i32, i32) {
    %c0_i32 = arith.constant 0 : i32
    %c0_i32_0 = arith.constant 0 : i32
    return %arg0, %c0_i32 : i32, i32
  }
  func.func @transform_1(%arg0: i32) -> (i32, i32) {
    %c0_i32 = arith.constant 0 : i32
    %c0_i32_0 = arith.constant 0 : i32
    return %arg0, %c0_i32 : i32, i32
  }
}

</mosaic_0001>

<llo_original>
// kernel: tpu_custom_call.1
$region0: #{tpu_custom_call.1}
  #allocation0 [shape = 'u32[]', space=smem, size = 0x4, offset = 0x4, fixed_abs, tag = 'smem constant byte address 0x4 - core index']
  #allocation1 [shape = 'u32[144,128]{1,0:T(1,128)}', space=vmem, size = 0x12000, scoped, tag = 'internal scratch']
  %s0 = inlined_call_operand.hbm [shape: f32[16,128], index: 0, kind: input, shape index: {}, may-alias: {0,1}]
  %s1 = inlined_call_operand.hbm [shape: f32[16,128], index: 1, kind: output, shape index: {}, may-alias: {0,1}]
  %s2 = sld [smem:[#allocation0]]
  $region18: #{tpu_custom_call.1} parent=0
    _
  %s4 = ssub.s32 1, %s2
  %s5 = scalar_select 0, %s4, %s2
  $region1: #{tpu_custom_call.1} parent=0
    #allocation2 [shape = 'u8[8192]{0}', space=vmem, size = 0x2000, scoped, tag = 'input window, operand 0, single buffered']
    #allocation3 [shape = 's32[1]{0}', space=sflag, size = 0x4, scoped, tag = 'scoped memory for tpu_custom_call.1']
    #allocation4 [shape = 's32[1]{0}', space=sflag, size = 0x4, scoped, tag = 'scoped memory for tpu_custom_call.1']
    #allocation5 [shape = 'u8[8192]{0}', space=vmem, size = 0x2000, scoped, tag = 'output window, operand 0, single buffered']
    %6 = vsyncpa [#allocation3], 0
    %7 = vsyncpa [#allocation4], 0
    // Predicated region
    $region2: #{tpu_custom_call.1} parent=1 // pred_check
      _
    $region3: #{tpu_custom_call.1} parent=1 // pred_check_branch
      %9 = sbr.rel (0) target = $region5
    $region4: #{tpu_custom_call.1} parent=1 // pred_region
      %s11 = ssub.s32 256, 256
      %12 = vsyncadd [#allocation3], %s11
      %s13 = sshll.u32 [#allocation2], 4
      %s14 = int_to_ptr.vmem [resolvable:$true] %s13
      %19 = dma.hbm_to_vmem [thread:$0]  %s0, 256, %s14, [#allocation3], 128, 128, 8
    $region5: #{tpu_custom_call.1} parent=1 // pred_fallthru
      _
    // Predicated region
    $region6: #{tpu_custom_call.1} parent=1 // pred_check
      _
    $region7: #{tpu_custom_call.1} parent=1 // pred_check_branch
      %21 = sbr.rel (0) target = $region9
    $region8: #{tpu_custom_call.1} parent=1 // pred_region
      %22 = dma.done [#allocation3], 256
    $region9: #{tpu_custom_call.1} parent=1 // pred_fallthru
      _
    %v23 = vld [vmem:[#allocation2] sm:$0xff]
    %v24 = vld [vmem:[#allocation2 + $0x8] sm:$0xff]
    %25 = vst [vmem:[#allocation5] sm:$0xff] %v23
    %26 = vst [vmem:[#allocation5 + $0x8] sm:$0xff] %v24
    // Predicated region
    $region10: #{tpu_custom_call.1} parent=1 // pred_check
      _
    $region11: #{tpu_custom_call.1} parent=1 // pred_check_branch
      %28 = sbr.rel (0) target = $region13
    $region12: #{tpu_custom_call.1} parent=1 // pred_region
      %s30 = ssub.s32 256, 256
      %31 = vsyncadd [#allocation4], %s30
      %s32 = sshll.u32 [#allocation5], 4
      %s33 = int_to_ptr.vmem [resolvable:$true] %s32
      %38 = dma.vmem_to_hbm [thread:$0]  %s33, 256, %s1, [#allocation4], 128, 128, 8
    $region13: #{tpu_custom_call.1} parent=1 // pred_fallthru
      _
    // Predicated region
    $region14: #{tpu_custom_call.1} parent=1 // pred_check
      _
    $region15: #{tpu_custom_call.1} parent=1 // pred_check_branch
      %40 = sbr.rel (0) target = $region17
    $region16: #{tpu_custom_call.1} parent=1 // pred_region
      %41 = dma.done [#allocation4], 256
    $region17: #{tpu_custom_call.1} parent=1 // pred_fallthru
      _
    %42 = vsyncpa [#allocation3], 1
    %43 = vsyncpa [#allocation4], 1

</llo_original>
